<compile_context>
chip_gen: v5e
topology: v5e:2x2
jax: 0.10.0
libtpu: 0.0.40
codegen_flags: <defaults>
</compile_context>

<pallas_src>
import functools

import jax
import jax.numpy as jnp
from jax import lax
from jax.experimental import pallas as pl
from jax.experimental.pallas import tpu as pltpu

BN_EPS = 1e-5
NEG_SLOPE = 0.01          # nn.LeakyReLU() default
LANE = 128
VMEM_LIMIT = 48 * 1024 * 1024   # safe on v5e/v6e (128 MiB) and v7x (64 MiB) physical VMEM


def _round_up(x, m):
    return (x + m - 1) // m * m


def _conv_stats_kernel(patches_ref, w_ref, gamma_ref, beta_ref,
                       conv_ref, stats_ref, sum_ref, sumsq_ref, *, m_true):
    """Pass 1: conv-as-matmul + global BN statistics accumulated across M tiles."""
    i = pl.program_id(0)

    @pl.when(i == 0)
    def _():
        sum_ref[...] = jnp.zeros_like(sum_ref)
        sumsq_ref[...] = jnp.zeros_like(sumsq_ref)

    # (TM, K) @ (K, Cp) on the MXU: bf16 inputs, f32 accumulation.
    acc = jnp.dot(patches_ref[...], w_ref[...], preferred_element_type=jnp.float32)
    conv_ref[...] = acc

    sum_ref[...] += jnp.sum(acc, axis=0, keepdims=True)
    sumsq_ref[...] += jnp.sum(acc * acc, axis=0, keepdims=True)

    @pl.when(i == pl.num_programs(0) - 1)
    def _():
        inv_m = 1.0 / m_true                              # static Python float
        mean = sum_ref[...] * inv_m
        var = sumsq_ref[...] * inv_m - mean * mean        # biased (train-mode) variance
        scale = gamma_ref[...] * lax.rsqrt(var + BN_EPS)
        shift = beta_ref[...] - mean * scale
        stats_ref[0:1, :] = scale
        stats_ref[1:2, :] = shift


def _bn_lrelu_kernel(stats_ref, conv_ref, out_ref):
    """Pass 2: one FMA per element for BN, one max for LeakyReLU."""
    scale = stats_ref[0:1, :]
    shift = stats_ref[1:2, :]
    y = conv_ref[...] * scale + shift
    out_ref[...] = jnp.maximum(y, NEG_SLOPE * y)


def _im2col(x_nhwc, kh, kw):
    # TODO(synk): replace the HBM-materialized im2col (kh*kw x activation traffic) with an
    # implicit-GEMM kernel that slides over the NHWC input directly inside the Pallas body.
    N, H, W, C = x_nhwc.shape
    Ho, Wo = H - kh + 1, W - kw + 1
    taps = [x_nhwc[:, i:i + Ho, j:j + Wo, :] for i in range(kh) for j in range(kw)]
    p = jnp.stack(taps, axis=3)                           # (N, Ho, Wo, kh*kw, C)
    return p.reshape(N * Ho * Wo, kh * kw * C), Ho, Wo


def convolution_block(x_nchw, weight, bias, gamma, beta, ksize=3, tm=256):
    """x_nchw: (N, Cin, H, W); weight: (Cout, Cin, kh, kw) (PyTorch layout).

    `bias` is accepted for interface parity but intentionally unused: a per-channel
    constant shift before train-mode BatchNorm cancels exactly (mean shifts, var unchanged).
    """
    del bias
    N, Cin, H, W = x_nchw.shape
    Cout = weight.shape[0]
    kh = kw = ksize

    x_nhwc = jnp.transpose(x_nchw, (0, 2, 3, 1))
    patches, Ho, Wo = _im2col(x_nhwc, kh, kw)             # (M, K)
    M, K = patches.shape

    # Padded, lane-dense problem sizes.
    cp = _round_up(Cout, LANE)                            # lane-dense output channels
    kp = _round_up(K, 16)                                 # bf16-sublane-friendly contraction
    mp = _round_up(M, tm)
    n_tiles = mp // tm

    # bf16 MXU operands, zero padding (a zero patch row contributes 0 to sum and sumsq).
    patches_p = jnp.zeros((mp, kp), jnp.bfloat16).at[:M, :K].set(
        patches.astype(jnp.bfloat16))
    w_mat = jnp.transpose(weight, (2, 3, 1, 0)).reshape(K, Cout)   # matches patch K-order
    w_p = jnp.zeros((kp, cp), jnp.bfloat16).at[:K, :Cout].set(w_mat.astype(jnp.bfloat16))
    gamma_p = jnp.zeros((1, cp), jnp.float32).at[:, :Cout].set(
        gamma.astype(jnp.float32).reshape(1, Cout))
    beta_p = jnp.zeros((1, cp), jnp.float32).at[:, :Cout].set(
        beta.astype(jnp.float32).reshape(1, Cout))

    # --- Pass 1: conv (tiled matmul) + global batch statistics -> fused scale/shift. ---
    conv, stats = pl.pallas_call(
        functools.partial(_conv_stats_kernel, m_true=float(M)),
        out_shape=(
            jax.ShapeDtypeStruct((mp, cp), jnp.float32),  # raw conv output
            jax.ShapeDtypeStruct((2, cp), jnp.float32),   # row0 = scale, row1 = shift
        ),
        grid_spec=pltpu.PrefetchScalarGridSpec(
            num_scalar_prefetch=0,
            grid=(n_tiles,),
            in_specs=[
                pl.BlockSpec((tm, kp), lambda i: (i, 0)),
                pl.BlockSpec((kp, cp), lambda i: (0, 0)),
                pl.BlockSpec((1, cp), lambda i: (0, 0)),
                pl.BlockSpec((1, cp), lambda i: (0, 0)),
            ],
            out_specs=(
                pl.BlockSpec((tm, cp), lambda i: (i, 0)),
                pl.BlockSpec((2, cp), lambda i: (0, 0)),
            ),
            scratch_shapes=[
                pltpu.VMEM((1, cp), jnp.float32),         # running per-channel sum
                pltpu.VMEM((1, cp), jnp.float32),         # running per-channel sum of squares
            ],
        ),
        compiler_params=pltpu.CompilerParams(
            dimension_semantics=("arbitrary",),           # stats accumulate across M tiles
            vmem_limit_bytes=VMEM_LIMIT,
        ),
    )(patches_p, w_p, gamma_p, beta_p)

    # --- Pass 2: normalize + affine + LeakyReLU (independent tiles -> megacore parallel). ---
    out = pl.pallas_call(
        _bn_lrelu_kernel,
        out_shape=jax.ShapeDtypeStruct((mp, cp), jnp.float32),
        grid_spec=pltpu.PrefetchScalarGridSpec(
            num_scalar_prefetch=0,
            grid=(n_tiles,),
            in_specs=[
                pl.BlockSpec((2, cp), lambda i: (0, 0)),
                pl.BlockSpec((tm, cp), lambda i: (i, 0)),
            ],
            out_specs=pl.BlockSpec((tm, cp), lambda i: (i, 0)),
        ),
        compiler_params=pltpu.CompilerParams(
            dimension_semantics=("parallel",),
            vmem_limit_bytes=VMEM_LIMIT,
        ),
    )(stats, conv)

    out_nhwc = out[:M, :Cout].reshape(N, Ho, Wo, Cout)
    return jnp.transpose(out_nhwc, (0, 3, 1, 2))          # back to NCHW


def _reference(x_nchw, weight, bias, gamma, beta):
    # Pure-JAX f32 reference (includes the conv bias; it cancels under train-mode BN).
    x_nhwc = jnp.transpose(x_nchw, (0, 2, 3, 1))
    w_hwio = jnp.transpose(weight, (2, 3, 1, 0))
    conv = lax.conv_general_dilated(
        x_nhwc, w_hwio, window_strides=(1, 1), padding="VALID",
        dimension_numbers=("NHWC", "HWIO", "NHWC"),
        preferred_element_type=jnp.float32,
    ) + bias.reshape(1, 1, 1, -1)
    mean = jnp.mean(conv, axis=(0, 1, 2), keepdims=True)
    var = jnp.mean((conv - mean) ** 2, axis=(0, 1, 2), keepdims=True)
    y = (conv - mean) * lax.rsqrt(var + BN_EPS) * gamma.reshape(1, 1, 1, -1) \
        + beta.reshape(1, 1, 1, -1)
    y = jnp.where(y >= 0, y, NEG_SLOPE * y)
    return jnp.transpose(y, (0, 3, 1, 2))


if __name__ == "__main__":
    key = jax.random.PRNGKey(0)
    k_x, k_w, k_b = jax.random.split(key, 3)

    N, Cin, Cout, H, W, ksize = 2, 4, 8, 16, 16, 3

    x = jax.random.normal(k_x, (N, Cin, H, W), dtype=jnp.float32)

    # Deterministic param init (shapes per nn.Conv2d / nn.BatchNorm2d defaults).
    fan_in = Cin * ksize * ksize
    bound = 1.0 / jnp.sqrt(fan_in)
    weight = jax.random.uniform(k_w, (Cout, Cin, ksize, ksize),
                                minval=-bound, maxval=bound, dtype=jnp.float32)
    bias = jax.random.uniform(k_b, (Cout,), minval=-bound, maxval=bound,
                              dtype=jnp.float32)
    gamma = jnp.ones((Cout,), dtype=jnp.float32)   # BatchNorm2d weight init
    beta = jnp.zeros((Cout,), dtype=jnp.float32)   # BatchNorm2d bias init

    out = convolution_block(x, weight, bias, gamma, beta, ksize=ksize)
    out = jax.block_until_ready(out)

    ref = _reference(x, weight, bias, gamma, beta)
    assert out.shape == (N, Cout, H - ksize + 1, W - ksize + 1)
    # bf16 MXU operands vs f32 reference: allow a slightly wider (still tight) tolerance.
    assert jnp.allclose(out, ref, rtol=2e-2, atol=2e-2)

    print("KERNEL_OK")
</pallas_src>

<mosaic_0001>
module attributes {stable_mosaic.version = 11 : i64} {
  func.func @_conv_stats_kernel(%arg0: i32, %arg1: memref<256x48xbf16, #tpu.memory_space<vmem>>, %arg2: memref<48x128xbf16, #tpu.memory_space<vmem>>, %arg3: memref<1x128xf32, #tpu.memory_space<vmem>>, %arg4: memref<1x128xf32, #tpu.memory_space<vmem>>, %arg5: memref<256x128xf32, #tpu.memory_space<vmem>>, %arg6: memref<2x128xf32, #tpu.memory_space<vmem>>, %arg7: memref<1x128xf32, #tpu.memory_space<vmem>>, %arg8: memref<1x128xf32, #tpu.memory_space<vmem>>) attributes {dimension_semantics = [#tpu.dimension_semantics<arbitrary>], iteration_bounds = array<i64: 2>, scalar_prefetch = 0 : i64, scratch_operands = 2 : i64, tpu.core_type = #tpu.core_type<tc>, window_params = [{transform_indices = @transform_0, window_bounds = array<i64: 256, 48>}, {pipeline_mode = #tpu.pipeline_mode<synchronous>, transform_indices = @transform_1, window_bounds = array<i64: 48, 128>}, {pipeline_mode = #tpu.pipeline_mode<synchronous>, transform_indices = @transform_2, window_bounds = array<i64: 1, 128>}, {pipeline_mode = #tpu.pipeline_mode<synchronous>, transform_indices = @transform_3, window_bounds = array<i64: 1, 128>}, {transform_indices = @transform_4, window_bounds = array<i64: 256, 128>}, {pipeline_mode = #tpu.pipeline_mode<synchronous>, transform_indices = @transform_5, window_bounds = array<i64: 2, 128>}]} {
    %c0_i32 = arith.constant 0 : i32
    %0 = arith.cmpi eq, %arg0, %c0_i32 : i32
    %1 = arith.extui %0 : i1 to i32
    %c0_i32_0 = arith.constant 0 : i32
    %2 = arith.cmpi ne, %1, %c0_i32_0 : i32
    scf.if %2 {
      %cst_17 = arith.constant 0.000000e+00 : f32
      %21 = vector.broadcast %cst_17 : f32 to vector<1x128xf32>
      %c0_18 = arith.constant 0 : index
      %c0_19 = arith.constant 0 : index
      %22 = vector.load %arg7[%c0_18, %c0_19] : memref<1x128xf32, #tpu.memory_space<vmem>>, vector<1x128xf32>
      tpu.vector_store %arg7[%c0_18, %c0_19], %21 {strides = array<i32>} : memref<1x128xf32, #tpu.memory_space<vmem>>, vector<1x128xf32>,
      %cst_20 = arith.constant 0.000000e+00 : f32
      %23 = vector.broadcast %cst_20 : f32 to vector<1x128xf32>
      %c0_21 = arith.constant 0 : index
      %c0_22 = arith.constant 0 : index
      %24 = vector.load %arg8[%c0_21, %c0_22] : memref<1x128xf32, #tpu.memory_space<vmem>>, vector<1x128xf32>
      tpu.vector_store %arg8[%c0_21, %c0_22], %23 {strides = array<i32>} : memref<1x128xf32, #tpu.memory_space<vmem>>, vector<1x128xf32>,
    } else {
    }
    %c0 = arith.constant 0 : index
    %c0_1 = arith.constant 0 : index
    %3 = vector.load %arg1[%c0, %c0_1] : memref<256x48xbf16, #tpu.memory_space<vmem>>, vector<256x48xbf16>
    %c0_2 = arith.constant 0 : index
    %c0_3 = arith.constant 0 : index
    %4 = vector.load %arg2[%c0_2, %c0_3] : memref<48x128xbf16, #tpu.memory_space<vmem>>, vector<48x128xbf16>
    %cst = arith.constant dense<0.000000e+00> : vector<256x128xf32>
    %5 = tpu.matmul %3, %4, %cst {dimension_numbers = #tpu.dot_dimension_numbers<[1], [0], [0], [1], [0, 0, 1, 1], [], []>} : vector<256x48xbf16>, vector<48x128xbf16>, vector<256x128xf32> -> vector<256x128xf32>
    %c0_4 = arith.constant 0 : index
    %c0_5 = arith.constant 0 : index
    %6 = vector.load %arg5[%c0_4, %c0_5] : memref<256x128xf32, #tpu.memory_space<vmem>>, vector<256x128xf32>
    tpu.vector_store %arg5[%c0_4, %c0_5], %5 {strides = array<i32>} : memref<256x128xf32, #tpu.memory_space<vmem>>, vector<256x128xf32>,
    %c0_6 = arith.constant 0 : index
    %c0_7 = arith.constant 0 : index
    %7 = vector.load %arg7[%c0_6, %c0_7] : memref<1x128xf32, #tpu.memory_space<vmem>>, vector<1x128xf32>
    %cst_8 = arith.constant dense<0.000000e+00> : vector<128xf32>
    %8 = vector.multi_reduction <add>, %5, %cst_8 [0] : vector<256x128xf32> to vector<128xf32>
    %9 = vector.shape_cast %8 : vector<128xf32> to vector<1x128xf32>
    %10 = arith.addf %7, %9 : vector<1x128xf32>
    %c0_9 = arith.constant 0 : index
    %c0_10 = arith.constant 0 : index
    %11 = vector.load %arg7[%c0_9, %c0_10] : memref<1x128xf32, #tpu.memory_space<vmem>>, vector<1x128xf32>
    tpu.vector_store %arg7[%c0_9, %c0_10], %10 {strides = array<i32>} : memref<1x128xf32, #tpu.memory_space<vmem>>, vector<1x128xf32>,
    %c0_11 = arith.constant 0 : index
    %c0_12 = arith.constant 0 : index
    %12 = vector.load %arg8[%c0_11, %c0_12] : memref<1x128xf32, #tpu.memory_space<vmem>>, vector<1x128xf32>
    %13 = arith.mulf %5, %5 : vector<256x128xf32>
    %cst_13 = arith.constant dense<0.000000e+00> : vector<128xf32>
    %14 = vector.multi_reduction <add>, %13, %cst_13 [0] : vector<256x128xf32> to vector<128xf32>
    %15 = vector.shape_cast %14 : vector<128xf32> to vector<1x128xf32>
    %16 = arith.addf %12, %15 : vector<1x128xf32>
    %c0_14 = arith.constant 0 : index
    %c0_15 = arith.constant 0 : index
    %17 = vector.load %arg8[%c0_14, %c0_15] : memref<1x128xf32, #tpu.memory_space<vmem>>, vector<1x128xf32>
    tpu.vector_store %arg8[%c0_14, %c0_15], %16 {strides = array<i32>} : memref<1x128xf32, #tpu.memory_space<vmem>>, vector<1x128xf32>,
    %c1_i32 = arith.constant 1 : i32
    %18 = arith.cmpi eq, %arg0, %c1_i32 : i32
    %19 = arith.extui %18 : i1 to i32
    %c0_i32_16 = arith.constant 0 : i32
    %20 = arith.cmpi ne, %19, %c0_i32_16 : i32
    scf.if %20 {
      %c0_17 = arith.constant 0 : index
      %c0_18 = arith.constant 0 : index
      %21 = vector.load %arg7[%c0_17, %c0_18] : memref<1x128xf32, #tpu.memory_space<vmem>>, vector<1x128xf32>
      %cst_19 = arith.constant 0.00255102036 : f32
      %22 = vector.broadcast %cst_19 : f32 to vector<1x128xf32>
      %23 = arith.mulf %21, %22 : vector<1x128xf32>
      %c0_20 = arith.constant 0 : index
      %c0_21 = arith.constant 0 : index
      %24 = vector.load %arg8[%c0_20, %c0_21] : memref<1x128xf32, #tpu.memory_space<vmem>>, vector<1x128xf32>
      %cst_22 = arith.constant 0.00255102036 : f32
      %25 = vector.broadcast %cst_22 : f32 to vector<1x128xf32>
      %26 = arith.mulf %24, %25 : vector<1x128xf32>
      %27 = arith.mulf %23, %23 : vector<1x128xf32>
      %28 = arith.subf %26, %27 : vector<1x128xf32>
      %c0_23 = arith.constant 0 : index
      %c0_24 = arith.constant 0 : index
      %29 = vector.load %arg3[%c0_23, %c0_24] : memref<1x128xf32, #tpu.memory_space<vmem>>, vector<1x128xf32>
      %cst_25 = arith.constant 9.99999974E-6 : f32
      %30 = vector.broadcast %cst_25 : f32 to vector<1x128xf32>
      %31 = arith.addf %28, %30 : vector<1x128xf32>
      %32 = math.rsqrt %31 : vector<1x128xf32>
      %33 = arith.mulf %29, %32 : vector<1x128xf32>
      %c0_26 = arith.constant 0 : index
      %c0_27 = arith.constant 0 : index
      %34 = vector.load %arg4[%c0_26, %c0_27] : memref<1x128xf32, #tpu.memory_space<vmem>>, vector<1x128xf32>
      %35 = arith.mulf %23, %33 : vector<1x128xf32>
      %36 = arith.subf %34, %35 : vector<1x128xf32>
      %c0_28 = arith.constant 0 : index
      %c0_29 = arith.constant 0 : index
      %37 = vector.load %arg6[%c0_28, %c0_29] : memref<2x128xf32, #tpu.memory_space<vmem>>, vector<1x128xf32>
      tpu.vector_store %arg6[%c0_28, %c0_29], %33 {strides = array<i32>} : memref<2x128xf32, #tpu.memory_space<vmem>>, vector<1x128xf32>,
      %c1 = arith.constant 1 : index
      %c0_30 = arith.constant 0 : index
      %38 = vector.load %arg6[%c1, %c0_30] : memref<2x128xf32, #tpu.memory_space<vmem>>, vector<1x128xf32>
      tpu.vector_store %arg6[%c1, %c0_30], %36 {strides = array<i32>} : memref<2x128xf32, #tpu.memory_space<vmem>>, vector<1x128xf32>,
    } else {
    }
    return
  }
  func.func @transform_0(%arg0: i32) -> (i32, i32) {
    %c0_i32 = arith.constant 0 : i32
    %c0_i32_0 = arith.constant 0 : i32
    return %arg0, %c0_i32 : i32, i32
  }
  func.func @transform_1(%arg0: i32) -> (i32, i32) {
    %c0_i32 = arith.constant 0 : i32
    %c0_i32_0 = arith.constant 0 : i32
    %c0_i32_1 = arith.constant 0 : i32
    return %c0_i32, %c0_i32_0 : i32, i32
  }
  func.func @transform_2(%arg0: i32) -> (i32, i32) {
    %c0_i32 = arith.constant 0 : i32
    %c0_i32_0 = arith.constant 0 : i32
    %c0_i32_1 = arith.constant 0 : i32
    return %c0_i32, %c0_i32_0 : i32, i32
  }
  func.func @transform_3(%arg0: i32) -> (i32, i32) {
    %c0_i32 = arith.constant 0 : i32
    %c0_i32_0 = arith.constant 0 : i32
    %c0_i32_1 = arith.constant 0 : i32
    return %c0_i32, %c0_i32_0 : i32, i32
  }
  func.func @transform_4(%arg0: i32) -> (i32, i32) {
    %c0_i32 = arith.constant 0 : i32
    %c0_i32_0 = arith.constant 0 : i32
    return %arg0, %c0_i32 : i32, i32
  }
  func.func @transform_5(%arg0: i32) -> (i32, i32) {
    %c0_i32 = arith.constant 0 : i32
    %c0_i32_0 = arith.constant 0 : i32
    %c0_i32_1 = arith.constant 0 : i32
    return %c0_i32, %c0_i32_0 : i32, i32
  }
}

</mosaic_0001>

<llo_original>
// kernel: tpu_custom_call.1
$region0: #{tpu_custom_call.1}
  #allocation0 [shape = 'u32[]', space=smem, size = 0x4, offset = 0x4, fixed_abs, tag = 'smem constant byte address 0x4 - core index']
  #allocation1 [shape = 'u32[72,128]{1,0:T(1,128)}', space=vmem, size = 0x9000, scoped, tag = 'internal scratch']
  #allocation2 [shape = 'f32[1,128]{1,0:T(1,128)}', space=vmem, size = 0x200, scoped, tag = 'scratch operand']
  #allocation3 [shape = 'f32[1,128]{1,0:T(1,128)}', space=vmem, size = 0x200, scoped, tag = 'scratch operand']
  %s0 = inlined_call_operand.vmem [shape: bf16[512,48], index: 0, kind: input, shape index: {}]
  %s1 = inlined_call_operand.vmem [shape: bf16[48,128], index: 1, kind: input, shape index: {}]
  %s2 = inlined_call_operand.vmem [shape: f32[1,128], index: 2, kind: input, shape index: {}]
  %s3 = inlined_call_operand.vmem [shape: f32[1,128], index: 3, kind: input, shape index: {}]
  %s4 = inlined_call_operand.hbm [shape: f32[512,128], index: 4, kind: output, shape index: {0}]
  %s5 = inlined_call_operand.hbm [shape: f32[2,128], index: 5, kind: output, shape index: {1}]
  %6 = xla_tuple %s4, %s5
  %s7 = sld [smem:[#allocation0]]
  $region65: #{tpu_custom_call.1} parent=0
    _
  %s9 = ssub.s32 1, %s7
  %s10 = scalar_select 0, %s9, %s7
  $region1: #{tpu_custom_call.1} parent=0
    #allocation4 [shape = 'u8[262144]{0}', space=vmem, size = 0x40000, scoped, tag = 'output window, operand 0']
    #allocation5 [shape = 's32[2]{0}', space=sflag, size = 0x8, scoped, tag = 'scoped memory for tpu_custom_call.1']
    #allocation6 [shape = 'u8[1024]{0}', space=vmem, size = 0x400, scoped, tag = 'output window, operand 1, single buffered']
    #allocation7 [shape = 's32[1]{0}', space=sflag, size = 0x4, scoped, tag = 'scoped memory for tpu_custom_call.1']
    %11 = vsyncpa [#allocation5], 0
    %s12 = scalar_lea.sflag [#allocation5], 1
    %13 = vsyncpa %s12, 0
    %14 = vsyncpa [#allocation7], 0
    loop: start=0, step=1, limit=4
    $region2: #{tpu_custom_call.1} parent=1 // loop_pre_header
      _
    $region3: #{tpu_custom_call.1} parent=1 // loop_header
      %s16 = sphi 0, %s20
      %p17 = scmp.ge.s32.totalorder %s16, 4
      %s26 = sphi 0, %s28
      %s29 = sphi 0, %s26
      %s30 = sphi 0, %s29
      %s46 = sphi 0, %s30
      %s50 = sphi 0, %s50
      %s52 = sphi 0, %s50
      %s53 = sphi 0, %s52
      %s67 = sphi 0, %s53
      %s71 = sphi 0, %s71
      %s73 = sphi 0, %s71
      %s74 = sphi 0, %s73
      %s88 = sphi 0, %s74
      %s92 = sphi 0, %s92
      %s94 = sphi 0, %s92
      %s95 = sphi 0, %s94
      %s109 = sphi 0, %s95
      %s115 = sphi 0, %s117
      %s118 = sphi 0, %s115
      %s119 = sphi 0, %s118
      %s135 = sphi 0, %s119
      %s139 = sphi 0, %s139
      %s141 = sphi 0, %s139
      %s142 = sphi 0, %s141
      %s156 = sphi 0, %s142
    $region4: #{tpu_custom_call.1} parent=1 // loop_header_branch
      %19 = sbr.rel (%p17) target = $region8
    $region5: #{tpu_custom_call.1} parent=1 // loop_body
      %s21 = ssub.s32 %s16, 1
      %s22 = ssub.s32 %s16, 2
      %s23 = sadd.s32 %s16, 1
      %s24 = ssub.s32 %s16, %s23
      %p25 = scmp.eq.s32.totalorder %s24, 0
      %s27 = sadd.s32 %s26, 1
      %s28 = scalar_select %p25, %s26, %s27
      %p31 = pneg %p25
      %p32 = scmp.eq.s32.totalorder %s16, 1
      %p33 = por %p31, %p32
      %p34 = scmp.ne.s32.totalorder %s26, %s29
      %p35 = scmp.eq.s32.totalorder %s16, 0
      %p36 = por %p34, %p35
      %p37 = scmp.ne.s32.totalorder %s26, %s29
      %p38 = scmp.eq.s32.totalorder %s21, 1
      %p39 = por %p37, %p38
      %p40 = scmp.ne.s32.totalorder %s29, %s30
      %p41 = scmp.eq.s32.totalorder %s21, 0
      %p42 = por %p40, %p41
      %p43 = scmp.ne.s32.totalorder %s29, %s30
      %p44 = scmp.eq.s32.totalorder %s22, 1
      %p45 = por %p43, %p44
      %p47 = scmp.ne.s32.totalorder %s30, %s46
      %p48 = scmp.eq.s32.totalorder %s22, 0
      %p49 = por %p47, %p48
      %s51 = sadd.s32 %s50, 1
      %p54 = scmp.eq.s32.totalorder %s16, 1
      %p55 = scmp.ne.s32.totalorder %s50, %s52
      %p56 = scmp.eq.s32.totalorder %s16, 0
      %p57 = por %p55, %p56
      %p58 = scmp.ne.s32.totalorder %s50, %s52
      %p59 = scmp.eq.s32.totalorder %s21, 1
      %p60 = por %p58, %p59
      %p61 = scmp.ne.s32.totalorder %s52, %s53
      %p62 = scmp.eq.s32.totalorder %s21, 0
      %p63 = por %p61, %p62
      %p64 = scmp.ne.s32.totalorder %s52, %s53
      %p65 = scmp.eq.s32.totalorder %s22, 1
      %p66 = por %p64, %p65
      %p68 = scmp.ne.s32.totalorder %s53, %s67
      %p69 = scmp.eq.s32.totalorder %s22, 0
      %p70 = por %p68, %p69
      %s72 = sadd.s32 %s71, 1
      %p75 = scmp.eq.s32.totalorder %s16, 1
      %p76 = scmp.ne.s32.totalorder %s71, %s73
      %p77 = scmp.eq.s32.totalorder %s16, 0
      %p78 = por %p76, %p77
      %p79 = scmp.ne.s32.totalorder %s71, %s73
      %p80 = scmp.eq.s32.totalorder %s21, 1
      %p81 = por %p79, %p80
      %p82 = scmp.ne.s32.totalorder %s73, %s74
      %p83 = scmp.eq.s32.totalorder %s21, 0
      %p84 = por %p82, %p83
      %p85 = scmp.ne.s32.totalorder %s73, %s74
      %p86 = scmp.eq.s32.totalorder %s22, 1
      %p87 = por %p85, %p86
      %p89 = scmp.ne.s32.totalorder %s74, %s88
      %p90 = scmp.eq.s32.totalorder %s22, 0
      %p91 = por %p89, %p90
      %s93 = sadd.s32 %s92, 1
      %p96 = scmp.eq.s32.totalorder %s16, 1
      %p97 = scmp.ne.s32.totalorder %s92, %s94
      %p98 = scmp.eq.s32.totalorder %s16, 0
      %p99 = por %p97, %p98
      %p100 = scmp.ne.s32.totalorder %s92, %s94
      %p101 = scmp.eq.s32.totalorder %s21, 1
      %p102 = por %p100, %p101
      %p103 = scmp.ne.s32.totalorder %s94, %s95
      %p104 = scmp.eq.s32.totalorder %s21, 0
      %p105 = por %p103, %p104
      %p106 = scmp.ne.s32.totalorder %s94, %s95
      %p107 = scmp.eq.s32.totalorder %s22, 1
      %p108 = por %p106, %p107
      %p110 = scmp.ne.s32.totalorder %s95, %s109
      %p111 = scmp.eq.s32.totalorder %s22, 0
      %p112 = por %p110, %p111
      %s113 = ssub.s32 %s16, %s23
      %p114 = scmp.eq.s32.totalorder %s113, 0
      %s116 = sadd.s32 %s115, 1
      %s117 = scalar_select %p114, %s115, %s116
      %p120 = pneg %p114
      %p121 = scmp.eq.s32.totalorder %s16, 1
      %p122 = por %p120, %p121
      %p123 = scmp.ne.s32.totalorder %s115, %s118
      %p124 = scmp.eq.s32.totalorder %s16, 0
      %p125 = por %p123, %p124
      %p126 = scmp.ne.s32.totalorder %s115, %s118
      %p127 = scmp.eq.s32.totalorder %s21, 1
      %p128 = por %p126, %p127
      %p129 = scmp.ne.s32.totalorder %s118, %s119
      %p130 = scmp.eq.s32.totalorder %s21, 0
      %p131 = por %p129, %p130
      %p132 = scmp.ne.s32.totalorder %s118, %s119
      %p133 = scmp.eq.s32.totalorder %s22, 1
      %p134 = por %p132, %p133
      %p136 = scmp.ne.s32.totalorder %s119, %s135
      %p137 = scmp.eq.s32.totalorder %s22, 0
      %p138 = por %p136, %p137
      %s140 = sadd.s32 %s139, 1
      %p143 = scmp.eq.s32.totalorder %s16, 1
      %p144 = scmp.ne.s32.totalorder %s139, %s141
      %p145 = scmp.eq.s32.totalorder %s16, 0
      %p146 = por %p144, %p145
      %p147 = scmp.ne.s32.totalorder %s139, %s141
      %p148 = scmp.eq.s32.totalorder %s21, 1
      %p149 = por %p147, %p148
      %p150 = scmp.ne.s32.totalorder %s141, %s142
      %p151 = scmp.eq.s32.totalorder %s21, 0
      %p152 = por %p150, %p151
      %p153 = scmp.ne.s32.totalorder %s141, %s142
      %p154 = scmp.eq.s32.totalorder %s22, 1
      %p155 = por %p153, %p154
      %p157 = scmp.ne.s32.totalorder %s142, %s156
      %p158 = scmp.eq.s32.totalorder %s22, 0
      %p159 = por %p157, %p158
      %p160 = scmp.le.s32.totalorder 1, %s16
      %p161 = scmp.lt.s32.totalorder %s16, 3
      %p162 = pnand %p160, %p161
      %p163 = pneg %p162
      // Predicated region
      $region9: #{tpu_custom_call.1} parent=5 // pred_check
        _
      $region10: #{tpu_custom_call.1} parent=5 // pred_check_branch
        %165 = sbr.rel (%p162) target = $region12
      $region11: #{tpu_custom_call.1} parent=5 // pred_region
        %s166 = ssub.s32 %s16, 1
        // Predicated region
        $region13: #{tpu_custom_call.1} parent=11 // pred_check
          %p167 = pneg %p63
        $region14: #{tpu_custom_call.1} parent=11 // pred_check_branch
          %169 = sbr.rel (%p167) target = $region16
        $region15: #{tpu_custom_call.1} parent=11 // pred_region
          _
        $region16: #{tpu_custom_call.1} parent=11 // pred_fallthru
          _
        // Predicated region
        $region17: #{tpu_custom_call.1} parent=11 // pred_check
          %p170 = pneg %p84
        $region18: #{tpu_custom_call.1} parent=11 // pred_check_branch
          %172 = sbr.rel (%p170) target = $region20
        $region19: #{tpu_custom_call.1} parent=11 // pred_region
          _
        $region20: #{tpu_custom_call.1} parent=11 // pred_fallthru
          _
        // Predicated region
        $region21: #{tpu_custom_call.1} parent=11 // pred_check
          %p173 = pneg %p105
        $region22: #{tpu_custom_call.1} parent=11 // pred_check_branch
          %175 = sbr.rel (%p173) target = $region24
        $region23: #{tpu_custom_call.1} parent=11 // pred_region
          _
        $region24: #{tpu_custom_call.1} parent=11 // pred_fallthru
          _
      $region12: #{tpu_custom_call.1} parent=5 // pred_fallthru
        _
      %p176 = scmp.lt.s32.totalorder %s16, 2
      // Predicated region
      $region25: #{tpu_custom_call.1} parent=5 // pred_check
        %p177 = pneg %p176
      $region26: #{tpu_custom_call.1} parent=5 // pred_check_branch
        %179 = sbr.rel (%p177) target = $region28
      $region27: #{tpu_custom_call.1} parent=5 // pred_region
        // Predicated region
        $region29: #{tpu_custom_call.1} parent=27 // pred_check
          %p180 = pneg %p36
        $region30: #{tpu_custom_call.1} parent=27 // pred_check_branch
          %182 = sbr.rel (%p180) target = $region32
        $region31: #{tpu_custom_call.1} parent=27 // pred_region
          %s183 = smul.u32 32, %s16
          %p184 = scmp.lt.s32.totalorder %s183, 63
          %s185 = scalar_select %p184, %s183, 63
          %s186 = smul.addr %s185, 4
          %s187 = scalar_lea.vmem %s0, %s186
          %s188 = smul.u32 32, %s16
        $region32: #{tpu_custom_call.1} parent=27 // pred_fallthru
          _
      $region28: #{tpu_custom_call.1} parent=5 // pred_fallthru
        _
      %p189 = scmp.le.s32.totalorder 1, %s16
      %p190 = scmp.lt.s32.totalorder %s16, 3
      %p191 = pnand %p189, %p190
      %p192 = pneg %p191
      // Predicated region
      $region33: #{tpu_custom_call.1} parent=5 // pred_check
        _
      $region34: #{tpu_custom_call.1} parent=5 // pred_check_branch
        %194 = sbr.rel (%p191) target = $region36
      $region35: #{tpu_custom_call.1} parent=5 // pred_region
        %s195 = ssub.s32 %s16, 1
        %s196 = smul.u32 32, %s21
        %p197 = scmp.lt.s32.totalorder %s196, 63
        %s198 = scalar_select %p197, %s196, 63
        %s199 = smul.addr %s198, 4
        %s200 = scalar_lea.vmem %s0, %s199
        %p201 = pneg %p42
        %p202 = pneg %p39
        %p203 = pneg %p63
        %p204 = pneg %p60
        %p205 = pneg %p84
        %p206 = pneg %p81
        %p207 = pneg %p105
        %p208 = pneg %p102
        %p209 = pneg %p131
        %p210 = pneg %p128
        %s211 = sand.u32 %s118, 1
        %s212 = scalar_lea.sflag [#allocation5], %s211
        %s213 = sand.u32 %s118, 1
        %s214 = smul.addr %s213, 256
        %s215 = scalar_lea.vmem [#allocation4], %s214
        %p216 = pneg %p152
        %p217 = pneg %p149
        %s218 = smul.u32 32, %s21
        %p219 = scmp.lt.s32.totalorder %s218, 63
        %s220 = scalar_select %p219, %s218, 63
        %s221 = smul.addr %s220, 4
        %s222 = scalar_lea.vmem %s0, %s221
        %s223 = smul.u32 32, %s21
        %s224 = smul.u32 32, %s21
        %p226 = scmp.eq.s32.totalorder %s21, 0
        // Predicated region
        $region37: #{tpu_custom_call.1} parent=35 // pred_check
          %p227 = pneg %p226
        $region38: #{tpu_custom_call.1} parent=35 // pred_check_branch
          %229 = sbr.rel (%p227) target = $region40
        $region39: #{tpu_custom_call.1} parent=35 // pred_region
          %230 = vst [vmem:[#allocation2] sm:$0x1] 0.0
          %231 = vst [vmem:[#allocation3] sm:$0x1] 0.0
        $region40: #{tpu_custom_call.1} parent=35 // pred_fallthru
          _
        %v232 = vld [vmem:[%s222] sm:$0xf]
        %v233 = vld [vmem:[%s222 + $0x4] sm:$0xf]
        %v234 = vld [vmem:[%s222 + $0x8] sm:$0xf]
        %v235 = vld [vmem:[%s222 + $0xc] sm:$0xf]
        %v236 = vld [vmem:[%s222 + $0x10] sm:$0xf]
        %v237 = vld [vmem:[%s222 + $0x14] sm:$0xf]
        %v238 = vld [vmem:[%s222 + $0x18] sm:$0xf]
        %v239 = vld [vmem:[%s222 + $0x1c] sm:$0xf]
        %v240 = vld [vmem:[%s222 + $0x20] sm:$0xf]
        %v241 = vld [vmem:[%s222 + $0x24] sm:$0xf]
        %v242 = vld [vmem:[%s222 + $0x28] sm:$0xf]
        %v243 = vld [vmem:[%s222 + $0x2c] sm:$0xf]
        %v244 = vld [vmem:[%s222 + $0x30] sm:$0xf]
        %v245 = vld [vmem:[%s222 + $0x34] sm:$0xf]
        %v246 = vld [vmem:[%s222 + $0x38] sm:$0xf]
        %v247 = vld [vmem:[%s222 + $0x3c] sm:$0xf]
        %v248 = vld [vmem:[%s222 + $0x40] sm:$0xf]
        %v249 = vld [vmem:[%s222 + $0x44] sm:$0xf]
        %v250 = vld [vmem:[%s222 + $0x48] sm:$0xf]
        %v251 = vld [vmem:[%s222 + $0x4c] sm:$0xf]
        %v252 = vld [vmem:[%s222 + $0x50] sm:$0xf]
        %v253 = vld [vmem:[%s222 + $0x54] sm:$0xf]
        %v254 = vld [vmem:[%s222 + $0x58] sm:$0xf]
        %v255 = vld [vmem:[%s222 + $0x5c] sm:$0xf]
        %v256 = vld [vmem:[%s222 + $0x60] sm:$0xf]
        %v257 = vld [vmem:[%s222 + $0x64] sm:$0xf]
        %v258 = vld [vmem:[%s222 + $0x68] sm:$0xf]
        %v259 = vld [vmem:[%s222 + $0x6c] sm:$0xf]
        %v260 = vld [vmem:[%s222 + $0x70] sm:$0xf]
        %v261 = vld [vmem:[%s222 + $0x74] sm:$0xf]
        %v262 = vld [vmem:[%s222 + $0x78] sm:$0xf]
        %v263 = vld [vmem:[%s222 + $0x7c] sm:$0xf]
        %v264 = vld [vmem:[%s1] sm:$0xf]
        %v265 = vld [vmem:[%s1 + $0x4] sm:$0xf]
        %v266 = vld [vmem:[%s1 + $0x8] sm:$0xf]
        %v267 = vld [vmem:[%s1 + $0xc] sm:$0xf]
        %v268 = vld [vmem:[%s1 + $0x10] sm:$0xf]
        %v269 = vld [vmem:[%s1 + $0x14] sm:$0xf]
        %v302 = vunpack.c.l.b16 %v232
        %v303 = vunpack.c.l.b16 %v233
        %v304 = vunpack.c.l.b16 %v234
        %v305 = vunpack.c.l.b16 %v235
        %v306 = vunpack.c.l.b16 %v236
        %v307 = vunpack.c.l.b16 %v237
        %v308 = vunpack.c.l.b16 %v238
        %v309 = vunpack.c.l.b16 %v239
        %v310 = vunpack.c.l.b16 %v240
        %v311 = vunpack.c.l.b16 %v241
        %v312 = vunpack.c.l.b16 %v242
        %v313 = vunpack.c.l.b16 %v243
        %v314 = vunpack.c.l.b16 %v244
        %v315 = vunpack.c.l.b16 %v245
        %v316 = vunpack.c.l.b16 %v246
        %v317 = vunpack.c.l.b16 %v247
        %v318 = vunpack.c.l.b16 %v248
        %v319 = vunpack.c.l.b16 %v249
        %v320 = vunpack.c.l.b16 %v250
        %v321 = vunpack.c.l.b16 %v251
        %v322 = vunpack.c.l.b16 %v252
        %v323 = vunpack.c.l.b16 %v253
        %v324 = vunpack.c.l.b16 %v254
        %v325 = vunpack.c.l.b16 %v255
        %v326 = vunpack.c.l.b16 %v256
        %v327 = vunpack.c.l.b16 %v257
        %v328 = vunpack.c.l.b16 %v258
        %v329 = vunpack.c.l.b16 %v259
        %v330 = vunpack.c.l.b16 %v260
        %v331 = vunpack.c.l.b16 %v261
        %v332 = vunpack.c.l.b16 %v262
        %v333 = vunpack.c.l.b16 %v263
        %v334 = vpack.c.b16 %v303, %v302
        %v335 = vpack.c.b16 %v305, %v304
        %v336 = vpack.c.b16 %v307, %v306
        %v337 = vpack.c.b16 %v309, %v308
        %v338 = vpack.c.b16 %v311, %v310
        %v339 = vpack.c.b16 %v313, %v312
        %v340 = vpack.c.b16 %v315, %v314
        %v341 = vpack.c.b16 %v317, %v316
        %v342 = vpack.c.b16 %v319, %v318
        %v343 = vpack.c.b16 %v321, %v320
        %v344 = vpack.c.b16 %v323, %v322
        %v345 = vpack.c.b16 %v325, %v324
        %v346 = vpack.c.b16 %v327, %v326
        %v347 = vpack.c.b16 %v329, %v328
        %v348 = vpack.c.b16 %v331, %v330
        %v349 = vpack.c.b16 %v333, %v332
        %v356 = vunpack.c.l.b16 %v264
        %v357 = vunpack.c.l.b16 %v265
        %v358 = vunpack.c.l.b16 %v266
        %v359 = vunpack.c.l.b16 %v267
        %v360 = vunpack.c.l.b16 %v268
        %v361 = vunpack.c.l.b16 %v269
        %v362 = vpack.c.b16 %v357, %v356
        %v363 = vpack.c.b16 %v359, %v358
        %v364 = vpack.c.b16 %v361, %v360
        %vm368 = vcmask 392192
        %v370 = vsel %vm368, %v334, 0
        %v373 = vsel %vm368, %v335, 0
        %v376 = vsel %vm368, %v336, 0
        %v379 = vsel %vm368, %v337, 0
        %v382 = vsel %vm368, %v338, 0
        %v385 = vsel %vm368, %v339, 0
        %v388 = vsel %vm368, %v340, 0
        %v391 = vsel %vm368, %v341, 0
        %v394 = vsel %vm368, %v342, 0
        %v397 = vsel %vm368, %v343, 0
        %v400 = vsel %vm368, %v344, 0
        %v403 = vsel %vm368, %v345, 0
        %v406 = vsel %vm368, %v346, 0
        %v409 = vsel %vm368, %v347, 0
        %v412 = vsel %vm368, %v348, 0
        %v415 = vsel %vm368, %v349, 0
        %417 = vmatpush.bf16.msra.mxu0 0
        %418 = vmatpush.bf16.msra.mxu0 0
        %419 = vmatpush.bf16.msra.mxu0 0
        %420 = vmatpush.bf16.msra.mxu0 0
        %421 = vmatpush.bf16.msra.mxu0 0
        %422 = vmatpush.bf16.msra.mxu0 %v364
        %423 = vmatpush.bf16.msra.mxu0 %v363
        %424 = vmatpush.bf16.msra.mxu0 %v362
        %425 = vmatmul.bf16.gmra.mxu0 %v370
        %v426 = vpop.f32.mrf.mxu0
        %v427 = vadd.f32 0.0, %v426
        %v428 = vpop.f32.mrf.mxu0
        %v429 = vadd.f32 0.0, %v428
        %430 = vmatmul.bf16.gmra.mxu0 %v373
        %v431 = vpop.f32.mrf.mxu0
        %v432 = vadd.f32 0.0, %v431
        %v433 = vpop.f32.mrf.mxu0
        %v434 = vadd.f32 0.0, %v433
        %435 = vmatmul.bf16.gmra.mxu0 %v376
        %v436 = vpop.f32.mrf.mxu0
        %v437 = vadd.f32 0.0, %v436
        %v438 = vpop.f32.mrf.mxu0
        %v439 = vadd.f32 0.0, %v438
        %440 = vmatmul.bf16.gmra.mxu0 %v379
        %v441 = vpop.f32.mrf.mxu0
        %v442 = vadd.f32 0.0, %v441
        %v443 = vpop.f32.mrf.mxu0
        %v444 = vadd.f32 0.0, %v443
        %445 = vmatmul.bf16.gmra.mxu0 %v382
        %v446 = vpop.f32.mrf.mxu0
        %v447 = vadd.f32 0.0, %v446
        %v448 = vpop.f32.mrf.mxu0
        %v449 = vadd.f32 0.0, %v448
        %450 = vmatmul.bf16.gmra.mxu0 %v385
        %v451 = vpop.f32.mrf.mxu0
        %v452 = vadd.f32 0.0, %v451
        %v453 = vpop.f32.mrf.mxu0
        %v454 = vadd.f32 0.0, %v453
        %455 = vmatmul.bf16.gmra.mxu0 %v388
        %v456 = vpop.f32.mrf.mxu0
        %v457 = vadd.f32 0.0, %v456
        %v458 = vpop.f32.mrf.mxu0
        %v459 = vadd.f32 0.0, %v458
        %460 = vmatmul.bf16.gmra.mxu0 %v391
        %v461 = vpop.f32.mrf.mxu0
        %v462 = vadd.f32 0.0, %v461
        %v463 = vpop.f32.mrf.mxu0
        %v464 = vadd.f32 0.0, %v463
        %465 = vmatmul.bf16.gmra.mxu0 %v394
        %v466 = vpop.f32.mrf.mxu0
        %v467 = vadd.f32 0.0, %v466
        %v468 = vpop.f32.mrf.mxu0
        %v469 = vadd.f32 0.0, %v468
        %470 = vmatmul.bf16.gmra.mxu0 %v397
        %v471 = vpop.f32.mrf.mxu0
        %v472 = vadd.f32 0.0, %v471
        %v473 = vpop.f32.mrf.mxu0
        %v474 = vadd.f32 0.0, %v473
        %475 = vmatmul.bf16.gmra.mxu0 %v400
        %v476 = vpop.f32.mrf.mxu0
        %v477 = vadd.f32 0.0, %v476
        %v478 = vpop.f32.mrf.mxu0
        %v479 = vadd.f32 0.0, %v478
        %480 = vmatmul.bf16.gmra.mxu0 %v403
        %v481 = vpop.f32.mrf.mxu0
        %v482 = vadd.f32 0.0, %v481
        %v483 = vpop.f32.mrf.mxu0
        %v484 = vadd.f32 0.0, %v483
        %485 = vmatmul.bf16.gmra.mxu0 %v406
        %v486 = vpop.f32.mrf.mxu0
        %v487 = vadd.f32 0.0, %v486
        %v488 = vpop.f32.mrf.mxu0
        %v489 = vadd.f32 0.0, %v488
        %490 = vmatmul.bf16.gmra.mxu0 %v409
        %v491 = vpop.f32.mrf.mxu0
        %v492 = vadd.f32 0.0, %v491
        %v493 = vpop.f32.mrf.mxu0
        %v494 = vadd.f32 0.0, %v493
        %495 = vmatmul.bf16.gmra.mxu0 %v412
        %v496 = vpop.f32.mrf.mxu0
        %v497 = vadd.f32 0.0, %v496
        %v498 = vpop.f32.mrf.mxu0
        %v499 = vadd.f32 0.0, %v498
        %500 = vmatmul.bf16.gmra.mxu0 %v415
        %v501 = vpop.f32.mrf.mxu0
        %v502 = vadd.f32 0.0, %v501
        %v503 = vpop.f32.mrf.mxu0
        %v504 = vadd.f32 0.0, %v503
        %505 = vdwg.mxu0
        %506 = vst [vmem:[%s215] sm:$0xff] %v427
        %507 = vst [vmem:[%s215 + $0x8] sm:$0xff] %v429
        %508 = vst [vmem:[%s215 + $0x10] sm:$0xff] %v432
        %509 = vst [vmem:[%s215 + $0x18] sm:$0xff] %v434
        %510 = vst [vmem:[%s215 + $0x20] sm:$0xff] %v437
        %511 = vst [vmem:[%s215 + $0x28] sm:$0xff] %v439
        %512 = vst [vmem:[%s215 + $0x30] sm:$0xff] %v442
        %513 = vst [vmem:[%s215 + $0x38] sm:$0xff] %v444
        %514 = vst [vmem:[%s215 + $0x40] sm:$0xff] %v447
        %515 = vst [vmem:[%s215 + $0x48] sm:$0xff] %v449
        %516 = vst [vmem:[%s215 + $0x50] sm:$0xff] %v452
        %517 = vst [vmem:[%s215 + $0x58] sm:$0xff] %v454
        %518 = vst [vmem:[%s215 + $0x60] sm:$0xff] %v457
        %519 = vst [vmem:[%s215 + $0x68] sm:$0xff] %v459
        %520 = vst [vmem:[%s215 + $0x70] sm:$0xff] %v462
        %521 = vst [vmem:[%s215 + $0x78] sm:$0xff] %v464
        %522 = vst [vmem:[%s215 + $0x80] sm:$0xff] %v467
        %523 = vst [vmem:[%s215 + $0x88] sm:$0xff] %v469
        %524 = vst [vmem:[%s215 + $0x90] sm:$0xff] %v472
        %525 = vst [vmem:[%s215 + $0x98] sm:$0xff] %v474
        %526 = vst [vmem:[%s215 + $0xa0] sm:$0xff] %v477
        %527 = vst [vmem:[%s215 + $0xa8] sm:$0xff] %v479
        %528 = vst [vmem:[%s215 + $0xb0] sm:$0xff] %v482
        %529 = vst [vmem:[%s215 + $0xb8] sm:$0xff] %v484
        %530 = vst [vmem:[%s215 + $0xc0] sm:$0xff] %v487
        %531 = vst [vmem:[%s215 + $0xc8] sm:$0xff] %v489
        %532 = vst [vmem:[%s215 + $0xd0] sm:$0xff] %v492
        %533 = vst [vmem:[%s215 + $0xd8] sm:$0xff] %v494
        %534 = vst [vmem:[%s215 + $0xe0] sm:$0xff] %v497
        %535 = vst [vmem:[%s215 + $0xe8] sm:$0xff] %v499
        %536 = vst [vmem:[%s215 + $0xf0] sm:$0xff] %v502
        %537 = vst [vmem:[%s215 + $0xf8] sm:$0xff] %v504
        %v538 = vld [vmem:[#allocation2] sm:$0x1]
        %v539 = vadd.f32 %v427, %v429
        %v540 = vadd.f32 %v539, %v432
        %v541 = vadd.f32 %v540, %v434
        %v542 = vadd.f32 %v541, %v437
        %v543 = vadd.f32 %v542, %v439
        %v544 = vadd.f32 %v543, %v442
        %v545 = vadd.f32 %v544, %v444
        %v546 = vadd.f32 %v545, %v447
        %v547 = vadd.f32 %v546, %v449
        %v548 = vadd.f32 %v547, %v452
        %v549 = vadd.f32 %v548, %v454
        %v550 = vadd.f32 %v549, %v457
        %v551 = vadd.f32 %v550, %v459
        %v552 = vadd.f32 %v551, %v462
        %v553 = vadd.f32 %v552, %v464
        %v554 = vadd.f32 %v553, %v467
        %v555 = vadd.f32 %v554, %v469
        %v556 = vadd.f32 %v555, %v472
        %v557 = vadd.f32 %v556, %v474
        %v558 = vadd.f32 %v557, %v477
        %v559 = vadd.f32 %v558, %v479
        %v560 = vadd.f32 %v559, %v482
        %v561 = vadd.f32 %v560, %v484
        %v562 = vadd.f32 %v561, %v487
        %v563 = vadd.f32 %v562, %v489
        %v564 = vadd.f32 %v563, %v492
        %v565 = vadd.f32 %v564, %v494
        %v566 = vadd.f32 %v565, %v497
        %v567 = vadd.f32 %v566, %v499
        %v568 = vadd.f32 %v567, %v502
        %v569 = vadd.f32 %v568, %v504
        %v570 = vrot.slane %v569, 4
        %v571 = vadd.f32 %v569, %v570
        %v572 = vrot.slane %v571, 2
        %v573 = vadd.f32 %v571, %v572
        %v574 = vrot.slane %v573, 1
        %v575 = vadd.f32 %v573, %v574
        %v576 = vadd.f32 %v538, %v575
        %577 = vst [vmem:[#allocation2] sm:$0x1] %v576
        %v578 = vld [vmem:[#allocation3] sm:$0x1]
        %v579 = vmul.f32 %v427, %v427
        %v580 = vmul.f32 %v429, %v429
        %v581 = vmul.f32 %v432, %v432
        %v582 = vmul.f32 %v434, %v434
        %v583 = vmul.f32 %v437, %v437
        %v584 = vmul.f32 %v439, %v439
        %v585 = vmul.f32 %v442, %v442
        %v586 = vmul.f32 %v444, %v444
        %v587 = vmul.f32 %v447, %v447
        %v588 = vmul.f32 %v449, %v449
        %v589 = vmul.f32 %v452, %v452
        %v590 = vmul.f32 %v454, %v454
        %v591 = vmul.f32 %v457, %v457
        %v592 = vmul.f32 %v459, %v459
        %v593 = vmul.f32 %v462, %v462
        %v594 = vmul.f32 %v464, %v464
        %v595 = vmul.f32 %v467, %v467
        %v596 = vmul.f32 %v469, %v469
        %v597 = vmul.f32 %v472, %v472
        %v598 = vmul.f32 %v474, %v474
        %v599 = vmul.f32 %v477, %v477
        %v600 = vmul.f32 %v479, %v479
        %v601 = vmul.f32 %v482, %v482
        %v602 = vmul.f32 %v484, %v484
        %v603 = vmul.f32 %v487, %v487
        %v604 = vmul.f32 %v489, %v489
        %v605 = vmul.f32 %v492, %v492
        %v606 = vmul.f32 %v494, %v494
        %v607 = vmul.f32 %v497, %v497
        %v608 = vmul.f32 %v499, %v499
        %v609 = vmul.f32 %v502, %v502
        %v610 = vmul.f32 %v504, %v504
        %v611 = vadd.f32 %v579, %v580
        %v612 = vadd.f32 %v611, %v581
        %v613 = vadd.f32 %v612, %v582
        %v614 = vadd.f32 %v613, %v583
        %v615 = vadd.f32 %v614, %v584
        %v616 = vadd.f32 %v615, %v585
        %v617 = vadd.f32 %v616, %v586
        %v618 = vadd.f32 %v617, %v587
        %v619 = vadd.f32 %v618, %v588
        %v620 = vadd.f32 %v619, %v589
        %v621 = vadd.f32 %v620, %v590
        %v622 = vadd.f32 %v621, %v591
        %v623 = vadd.f32 %v622, %v592
        %v624 = vadd.f32 %v623, %v593
        %v625 = vadd.f32 %v624, %v594
        %v626 = vadd.f32 %v625, %v595
        %v627 = vadd.f32 %v626, %v596
        %v628 = vadd.f32 %v627, %v597
        %v629 = vadd.f32 %v628, %v598
        %v630 = vadd.f32 %v629, %v599
        %v631 = vadd.f32 %v630, %v600
        %v632 = vadd.f32 %v631, %v601
        %v633 = vadd.f32 %v632, %v602
        %v634 = vadd.f32 %v633, %v603
        %v635 = vadd.f32 %v634, %v604
        %v636 = vadd.f32 %v635, %v605
        %v637 = vadd.f32 %v636, %v606
        %v638 = vadd.f32 %v637, %v607
        %v639 = vadd.f32 %v638, %v608
        %v640 = vadd.f32 %v639, %v609
        %v641 = vadd.f32 %v640, %v610
        %v642 = vrot.slane %v641, 4
        %v643 = vadd.f32 %v641, %v642
        %v644 = vrot.slane %v643, 2
        %v645 = vadd.f32 %v643, %v644
        %v646 = vrot.slane %v645, 1
        %v647 = vadd.f32 %v645, %v646
        %v648 = vadd.f32 %v578, %v647
        %649 = vst [vmem:[#allocation3] sm:$0x1] %v648
        %p650 = scmp.eq.s32.totalorder %s21, 1
        // Predicated region
        $region41: #{tpu_custom_call.1} parent=35 // pred_check
          %p651 = pneg %p650
        $region42: #{tpu_custom_call.1} parent=35 // pred_check_branch
          %653 = sbr.rel (%p651) target = $region44
        $region43: #{tpu_custom_call.1} parent=35 // pred_region
          %v654 = vld [vmem:[#allocation2] sm:$0x1]
          %v655 = vmul.f32 %v654, 0.0025510204
          %v656 = vld [vmem:[#allocation3] sm:$0x1]
          %v657 = vmul.f32 %v656, 0.0025510204
          %v658 = vmul.f32 %v655, %v655
          %v659 = vsub.f32 %v657, %v658
          %v660 = vld [vmem:[%s2] sm:$0x1]
          %v661 = vadd.f32 %v659, 1e-05
          %v662 = vrsqrt.pop %v661
          %v663 = vmul.f32 %v662, %v661
          %v664 = vmul.f32 %v663, %v662
          %v665 = vmul.f32 0.5, %v664
          %v666 = vsub.f32 1.5, %v665
          %v667 = vmul.f32 %v662, %v666
          %vm668 = vweird.f32 %v661
          %vm669 = vweird.f32 %v662
          %vm670 = vmor %vm668, %vm669
          %v671 = vsel %vm670, %v662, %v667
          %v672 = vmul.f32 %v660, %v671
          %v673 = vld [vmem:[%s3] sm:$0x1]
          %v674 = vmul.f32 %v655, %v672
          %v675 = vsub.f32 %v673, %v674
          %676 = vst [vmem:[#allocation6] sm:$0x1] %v672
          %677 = vst [vmem:[#allocation6 + $0x1] sm:$0x1] %v675
        $region44: #{tpu_custom_call.1} parent=35 // pred_fallthru
          _
        %s678 = sand.u32 %s118, 1
        %s679 = scalar_lea.sflag [#allocation5], %s678
        %s680 = sand.u32 %s118, 1
        %s681 = smul.addr %s680, 256
        %s682 = scalar_lea.vmem [#allocation4], %s681
        // Predicated region
        $region45: #{tpu_custom_call.1} parent=35 // pred_check
          %p683 = pneg %p128
        $region46: #{tpu_custom_call.1} parent=35 // pred_check_branch
          %685 = sbr.rel (%p683) target = $region48
        $region47: #{tpu_custom_call.1} parent=35 // pred_region
          %s686 = smul.u32 32, %s21
          %688 = vsyncadd %s679, 0
          %s689 = smul.addr %s686, 8
          %s690 = scalar_lea.hbm %s4, %s689
          %s691 = sshll.u32 %s682, 4
          %s692 = int_to_ptr.vmem [resolvable:$true] %s691
          %s693 = sshll.u32 %s690, 4
          %s694 = int_to_ptr.hbm [resolvable:$true] %s693
          %699 = dma.vmem_to_hbm [thread:$0]  %s692, 4096, %s694, %s679, 128, 128, 8
        $region48: #{tpu_custom_call.1} parent=35 // pred_fallthru
          _
        // Predicated region
        $region49: #{tpu_custom_call.1} parent=35 // pred_check
          %p700 = pneg %p149
        $region50: #{tpu_custom_call.1} parent=35 // pred_check_branch
          %702 = sbr.rel (%p700) target = $region52
        $region51: #{tpu_custom_call.1} parent=35 // pred_region
          %704 = vsyncadd [#allocation7], 0
          %s706 = sshll.u32 [#allocation6], 4
          %s707 = int_to_ptr.vmem [resolvable:$true] %s706
          %s708 = sshll.u32 %s5, 4
          %s709 = int_to_ptr.hbm [resolvable:$true] %s708
          %711 = dma.vmem_to_hbm [thread:$0]  %s707, 32, %s709, [#allocation7]
        $region52: #{tpu_custom_call.1} parent=35 // pred_fallthru
          _
        // Predicated region
        $region53: #{tpu_custom_call.1} parent=35 // pred_check
          %p712 = pneg %p149
        $region54: #{tpu_custom_call.1} parent=35 // pred_check_branch
          %714 = sbr.rel (%p712) target = $region56
        $region55: #{tpu_custom_call.1} parent=35 // pred_region
          %716 = dma.done [#allocation7], 32
        $region56: #{tpu_custom_call.1} parent=35 // pred_fallthru
          _
      $region36: #{tpu_custom_call.1} parent=5 // pred_fallthru
        _
      %p717 = scmp.le.s32.totalorder 2, %s16
      // Predicated region
      $region57: #{tpu_custom_call.1} parent=5 // pred_check
        %p718 = pneg %p717
      $region58: #{tpu_custom_call.1} parent=5 // pred_check_branch
        %720 = sbr.rel (%p718) target = $region60
      $region59: #{tpu_custom_call.1} parent=5 // pred_region
        %s721 = ssub.s32 %s16, 2
        // Predicated region
        $region61: #{tpu_custom_call.1} parent=59 // pred_check
          %p722 = pneg %p134
        $region62: #{tpu_custom_call.1} parent=59 // pred_check_branch
          %724 = sbr.rel (%p722) target = $region64
        $region63: #{tpu_custom_call.1} parent=59 // pred_region
          %s725 = sand.u32 %s119, 1
          %s726 = scalar_lea.sflag [#allocation5], %s725
          %s727 = sand.u32 %s119, 1
          %s728 = smul.addr %s727, 256
          %s729 = scalar_lea.vmem [#allocation4], %s728
          %731 = dma.done %s726, 4096
        $region64: #{tpu_custom_call.1} parent=59 // pred_fallthru
          _
      $region60: #{tpu_custom_call.1} parent=5 // pred_fallthru
        _
    $region6: #{tpu_custom_call.1} parent=1 // loop_footer
      %s20 = sadd.s32 1, %s16
    $region7: #{tpu_custom_call.1} parent=1 // loop_footer_branch
      %15 = sbr.rel target = $region3
    $region8: #{tpu_custom_call.1} parent=1 // loop_exit
      _
    %732 = vsyncpa [#allocation5], 1
    %s733 = scalar_lea.sflag [#allocation5], 1
    %734 = vsyncpa %s733, 1
    %735 = vsyncpa [#allocation7], 1

</llo_original>
